<compile_context>
chip_gen: v7x
topology: tpu7x:2x2x1
jax: 0.10.0
libtpu: 0.0.40
codegen_flags: <defaults>
</compile_context>

<pallas_src>
import math

import jax
import jax.numpy as jnp
from jax.experimental import pallas as pl
from jax.experimental.pallas import tpu as pltpu

_LANE = 128
_SUBLANE = 8
_MIN_GRID_STEPS = 4   # >= 2 steps lets the "parallel" axis shard across v7x's 2 TCs
_MAX_FOLD = 16


def _round_up(x, m):
    return ((x + m - 1) // m) * m


def _fold_factor(in_dim, out_dim):
    """Smallest F with F*in_dim and F*out_dim both multiples of 128 (lane-dense IO)."""
    f_in = _LANE // math.gcd(in_dim, _LANE)
    f_out = _LANE // math.gcd(out_dim, _LANE)
    f = f_in * f_out // math.gcd(f_in, f_out)
    return f if f <= _MAX_FOLD else 1


def _vae_decoder_kernel(x_ref, wt_ref, b_ref, o_ref):
    # x arrives in its HBM dtype; cast to bf16 on the VPU right before the MXU
    # (free under the HBM roofline; avoids a separate XLA cast pass over x).
    x = x_ref[...].astype(jnp.bfloat16)
    y = jnp.dot(x, wt_ref[...], preferred_element_type=jnp.float32)
    y = y + b_ref[...]                     # (1, N) f32 bias broadcasts over rows
    o_ref[...] = jnp.maximum(y, 0.0).astype(o_ref.dtype)


def prepare_vae_decoder_params(weight, bias):
    """One-time (model-load) parameter prep, hoisted out of the hot path.

    weight: (out_dim, in_dim)  -- PyTorch nn.Linear layout.   bias: (out_dim,).

    Builds a block-diagonal bf16 weight diag(W^T, ..., W^T) of shape
    (fold*in_dim, fold*out_dim) so `fold` logical rows are processed as one lane-dense
    physical row; x.reshape(m/fold, fold*in_dim) @ W_bd is bit-identical in memory to
    the (m, out_dim) result (free reshapes on both ends, zero padded columns).
    """
    out_dim, in_dim = weight.shape
    fold = _fold_factor(in_dim, out_dim)
    wt = jnp.transpose(weight).astype(jnp.bfloat16)          # (in_dim, out_dim)
    if fold > 1:
        n_pad = fold * out_dim                                # already a 128-multiple
        wbd = jnp.zeros((fold * in_dim, n_pad), jnp.bfloat16)
        for f in range(fold):                                 # exact zeros off-diagonal
            wbd = wbd.at[f * in_dim:(f + 1) * in_dim,
                         f * out_dim:(f + 1) * out_dim].set(wt)
        b = jnp.tile(bias.astype(jnp.float32), fold).reshape(1, n_pad)
    else:
        # Fallback (odd dims): lane-pad the output columns instead of folding.
        n_pad = _round_up(out_dim, _LANE)
        wbd = jnp.pad(wt, ((0, 0), (0, n_pad - out_dim)))
        b = jnp.pad(bias.astype(jnp.float32), (0, n_pad - out_dim)).reshape(1, n_pad)
    return {"wt": wbd, "b": b, "fold": fold, "in_dim": in_dim,
            "out_dim": out_dim, "n_pad": n_pad}


def vae_decoder_forward(inputs, params, *, tile_rows=8192, out_dtype=jnp.float32,
                        min_rows_for_pallas=512):
    """Equivalent of relu(Linear(in_dim, out_dim)(inputs.reshape(-1, in_dim)))."""
    wt, b = params["wt"], params["b"]
    fold, in_dim, out_dim, n_pad = (params["fold"], params["in_dim"],
                                    params["out_dim"], params["n_pad"])

    x = jnp.reshape(inputs, (-1, in_dim))       # free (row-major, contiguous)
    m = x.shape[0]

    # Small-M fallback: launch + pipeline prologue dominate; let XLA fuse it.
    if m < min_rows_for_pallas:
        w0 = wt[:in_dim, :out_dim].astype(jnp.float32)        # diagonal block = W^T
        y = jnp.dot(x.astype(jnp.float32), w0) + b[0, :out_dim]
        return jnp.maximum(y, 0.0).astype(out_dtype)

    # Fold `fold` logical rows into one lane-dense physical row (free when m % fold == 0;
    # otherwise pad at most fold-1 rows).
    m_pad = _round_up(m, fold)
    if m_pad != m:
        x = jnp.pad(x, ((0, m_pad - m), (0, 0)))
    k = fold * in_dim
    m_phys = m_pad // fold
    x = x.reshape(m_phys, k)

    # Physical row tile: as big as requested, but keep >= _MIN_GRID_STEPS grid steps
    # (so both v7x TensorCores get work) and a multiple of 8 sublanes.
    tm = max(tile_rows // fold, _SUBLANE)
    tm = min(tm, pl.cdiv(m_phys, _MIN_GRID_STEPS))
    tm = _round_up(max(tm, _SUBLANE), _SUBLANE)
    grid = (pl.cdiv(m_phys, tm),)   # partial last block: OOB rows masked on writeback

    out = pl.pallas_call(
        _vae_decoder_kernel,
        out_shape=jax.ShapeDtypeStruct((m_phys, n_pad), out_dtype),
        grid_spec=pltpu.PrefetchScalarGridSpec(
            num_scalar_prefetch=0,
            grid=grid,
            in_specs=[
                pl.BlockSpec((tm, k), lambda i: (i, 0)),       # streamed row tiles
                pl.BlockSpec((k, n_pad), lambda i: (0, 0)),    # weight resident across tiles
                pl.BlockSpec((1, n_pad), lambda i: (0, 0)),    # bias resident across tiles
            ],
            out_specs=pl.BlockSpec((tm, n_pad), lambda i: (i, 0)),  # lane-dense stores
        ),
        compiler_params=pltpu.CompilerParams(
            dimension_semantics=("parallel",),   # row tiles are independent
            # Explicit limit: v5e's default scoped VMEM is only 16 MiB; at the default
            # tile this kernel uses ~6 MiB double-buffered, well under v7x's 64 MiB too.
            vmem_limit_bytes=32 * 1024 * 1024,
        ),
    )(x, wt, b)

    if fold > 1:
        out = out.reshape(m_pad, out_dim)        # free: memory is already (m_pad, out_dim)
        return out if m_pad == m else out[:m]
    return out[:m, :out_dim]


def reference_forward(inputs, weight, bias):
    x = jnp.reshape(inputs, (-1, weight.shape[1])).astype(jnp.float32)
    y = x @ weight.astype(jnp.float32).T + bias.astype(jnp.float32)
    return jnp.maximum(y, 0.0)


if __name__ == "__main__":
    input_dim = 32
    output_dim = 64

    key = jax.random.PRNGKey(0)
    k_x, k_w, k_b, k_x2, k_x3 = jax.random.split(key, 5)

    # PyTorch Linear-style deterministic init: weight (out, in), bias (out,).
    bound = 1.0 / (input_dim ** 0.5)
    weight = jax.random.uniform(k_w, (output_dim, input_dim),
                                minval=-bound, maxval=bound, dtype=jnp.float32)
    bias = jax.random.uniform(k_b, (output_dim,),
                              minval=-bound, maxval=bound, dtype=jnp.float32)

    params = prepare_vae_decoder_params(weight, bias)   # one-time, off the hot path

    # Case 1: tiny latent batch (batch=2, tracks=4) -> m=8 rows; force the Pallas path.
    inputs1 = jax.random.normal(k_x, (2, 4, input_dim), dtype=jnp.float32)
    out1 = jax.block_until_ready(vae_decoder_forward(inputs1, params, min_rows_for_pallas=0))
    ref1 = reference_forward(inputs1, weight, bias)
    assert out1.shape == (8, output_dim), out1.shape
    assert jnp.allclose(out1, ref1, atol=3e-2, rtol=3e-2), "mismatch vs reference (case 1)"

    # Case 2: ragged m=35 (not a multiple of the 4-row fold), tiny tile -> multi-step grid
    # with a partial last block.
    inputs2 = jax.random.normal(k_x2, (5, 7, input_dim), dtype=jnp.float32)
    out2 = jax.block_until_ready(
        vae_decoder_forward(inputs2, params, tile_rows=16, min_rows_for_pallas=0))
    ref2 = reference_forward(inputs2, weight, bias)
    assert out2.shape == (35, output_dim), out2.shape
    assert jnp.allclose(out2, ref2, atol=3e-2, rtol=3e-2), "mismatch vs reference (case 2)"

    # Case 3: m=1024 rows with default settings (Pallas path, multi-step parallel grid).
    inputs3 = jax.random.normal(k_x3, (32, 32, input_dim), dtype=jnp.float32)
    out3 = jax.block_until_ready(vae_decoder_forward(inputs3, params))
    ref3 = reference_forward(inputs3, weight, bias)
    assert out3.shape == (1024, output_dim), out3.shape
    assert jnp.allclose(out3, ref3, atol=3e-2, rtol=3e-2), "mismatch vs reference (case 3)"

    # Case 4: small-M fused-XLA fallback (default threshold) agrees too.
    out4 = jax.block_until_ready(vae_decoder_forward(inputs1, params))
    assert jnp.allclose(out4, ref1, atol=3e-2, rtol=3e-2), "mismatch vs reference (case 4)"

    print("KERNEL_OK")
</pallas_src>

<mosaic_0001>
module attributes {stable_mosaic.version = 11 : i64} {
  func.func @_vae_decoder_kernel(%arg0: i32, %arg1: memref<8x128xf32, #tpu.memory_space<vmem>>, %arg2: memref<128x256xbf16, #tpu.memory_space<vmem>>, %arg3: memref<1x256xf32, #tpu.memory_space<vmem>>, %arg4: memref<8x256xf32, #tpu.memory_space<vmem>>) attributes {dimension_semantics = [#tpu.dimension_semantics<parallel>], iteration_bounds = array<i64: 1>, scalar_prefetch = 0 : i64, scratch_operands = 0 : i64, tpu.core_type = #tpu.core_type<tc>, window_params = [{transform_indices = @transform_0, window_bounds = array<i64: 8, 128>}, {pipeline_mode = #tpu.pipeline_mode<synchronous>, transform_indices = @transform_1, window_bounds = array<i64: 128, 256>}, {pipeline_mode = #tpu.pipeline_mode<synchronous>, transform_indices = @transform_2, window_bounds = array<i64: 1, 256>}, {transform_indices = @transform_3, window_bounds = array<i64: 8, 256>}]} {
    %c0 = arith.constant 0 : index
    %c0_0 = arith.constant 0 : index
    %0 = vector.load %arg1[%c0, %c0_0] : memref<8x128xf32, #tpu.memory_space<vmem>>, vector<8x128xf32>
    %1 = arith.truncf %0 : vector<8x128xf32> to vector<8x128xbf16>
    %c0_1 = arith.constant 0 : index
    %c0_2 = arith.constant 0 : index
    %2 = vector.load %arg2[%c0_1, %c0_2] : memref<128x256xbf16, #tpu.memory_space<vmem>>, vector<128x256xbf16>
    %cst = arith.constant dense<0.000000e+00> : vector<8x256xf32>
    %3 = tpu.matmul %1, %2, %cst {dimension_numbers = #tpu.dot_dimension_numbers<[1], [0], [0], [1], [0, 0, 1, 1], [], []>} : vector<8x128xbf16>, vector<128x256xbf16>, vector<8x256xf32> -> vector<8x256xf32>
    %c0_3 = arith.constant 0 : index
    %c0_4 = arith.constant 0 : index
    %4 = vector.load %arg3[%c0_3, %c0_4] : memref<1x256xf32, #tpu.memory_space<vmem>>, vector<1x256xf32>
    %5 = vector.broadcast %4 : vector<1x256xf32> to vector<8x256xf32>
    %6 = arith.addf %3, %5 : vector<8x256xf32>
    %cst_5 = arith.constant 0.000000e+00 : f32
    %7 = vector.broadcast %cst_5 : f32 to vector<8x256xf32>
    %8 = arith.maximumf %6, %7 : vector<8x256xf32>
    %c0_6 = arith.constant 0 : index
    %c0_7 = arith.constant 0 : index
    %9 = vector.load %arg4[%c0_6, %c0_7] : memref<8x256xf32, #tpu.memory_space<vmem>>, vector<8x256xf32>
    tpu.vector_store %arg4[%c0_6, %c0_7], %8 {strides = array<i32>} : memref<8x256xf32, #tpu.memory_space<vmem>>, vector<8x256xf32>,
    return
  }
  func.func @transform_0(%arg0: i32) -> (i32, i32) {
    %c0_i32 = arith.constant 0 : i32
    %c0_i32_0 = arith.constant 0 : i32
    return %arg0, %c0_i32 : i32, i32
  }
  func.func @transform_1(%arg0: i32) -> (i32, i32) {
    %c0_i32 = arith.constant 0 : i32
    %c0_i32_0 = arith.constant 0 : i32
    %c0_i32_1 = arith.constant 0 : i32
    return %c0_i32, %c0_i32_0 : i32, i32
  }
  func.func @transform_2(%arg0: i32) -> (i32, i32) {
    %c0_i32 = arith.constant 0 : i32
    %c0_i32_0 = arith.constant 0 : i32
    %c0_i32_1 = arith.constant 0 : i32
    return %c0_i32, %c0_i32_0 : i32, i32
  }
  func.func @transform_3(%arg0: i32) -> (i32, i32) {
    %c0_i32 = arith.constant 0 : i32
    %c0_i32_0 = arith.constant 0 : i32
    return %arg0, %c0_i32 : i32, i32
  }
}

</mosaic_0001>

<llo_original>
// kernel: tpu_custom_call.1
$region0: #{tpu_custom_call.1}
  #allocation0 [shape = 'u32[]', space=smem, size = 0x4, offset = 0x4, fixed_abs, tag = 'smem constant byte address 0x4 - core index']
  #allocation1 [shape = 'u32[144,128]{1,0:T(1,128)}', space=vmem, size = 0x12000, scoped, tag = 'internal scratch']
  %s0 = inlined_call_operand.hbm [shape: f32[2,128], index: 0, kind: input, shape index: {}]
  %s1 = inlined_call_operand.hbm [shape: bf16[128,256], index: 1, kind: input, shape index: {}]
  %s2 = inlined_call_operand.vmem [shape: f32[1,256], index: 2, kind: input, shape index: {}]
  %s3 = inlined_call_operand.hbm [shape: f32[2,256], index: 3, kind: output, shape index: {}]
  %s4 = sld [smem:[#allocation0]]
  $region30: #{tpu_custom_call.1} parent=0
    _
  %s6 = ssub.s32 1, %s4
  %s7 = scalar_select 0, %s6, %s4
  $region1: #{tpu_custom_call.1} parent=0
    #allocation2 [shape = 'u8[4096]{0}', space=vmem, size = 0x1000, scoped, tag = 'input window, operand 0, single buffered']
    #allocation3 [shape = 's32[1]{0}', space=sflag, size = 0x4, scoped, tag = 'scoped memory for tpu_custom_call.1']
    #allocation4 [shape = 's32[1]{0}', space=sflag, size = 0x4, scoped, tag = 'scoped memory for tpu_custom_call.1']
    #allocation5 [shape = 'u8[65536]{0}', space=vmem, size = 0x10000, scoped, tag = 'input window, operand 1, single buffered']
    #allocation6 [shape = 's32[1]{0}', space=sflag, size = 0x4, scoped, tag = 'scoped memory for tpu_custom_call.1']
    #allocation7 [shape = 'u8[8192]{0}', space=vmem, size = 0x2000, scoped, tag = 'output window, operand 0, single buffered']
    %8 = vsyncpa [#allocation3], 0
    %9 = vsyncpa [#allocation6], 0
    %10 = vsyncpa [#allocation4], 0
    // Predicated region
    $region2: #{tpu_custom_call.1} parent=1 // pred_check
      _
    $region3: #{tpu_custom_call.1} parent=1 // pred_check_branch
      %12 = sbr.rel (0) target = $region5
    $region4: #{tpu_custom_call.1} parent=1 // pred_region
      %s14 = ssub.s32 128, 32
      %15 = vsyncadd [#allocation3], %s14
      %s16 = sshll.u32 [#allocation2], 4
      %s17 = int_to_ptr.vmem [resolvable:$true] %s16
      %22 = dma.hbm_to_vmem [thread:$0]  %s0, 32, %s17, [#allocation3], 32, 32, 2
    $region5: #{tpu_custom_call.1} parent=1 // pred_fallthru
      _
    // Predicated region
    $region6: #{tpu_custom_call.1} parent=1 // pred_check
      _
    $region7: #{tpu_custom_call.1} parent=1 // pred_check_branch
      %24 = sbr.rel (0) target = $region9
    $region8: #{tpu_custom_call.1} parent=1 // pred_region
      %s26 = ssub.s32 2048, 2048
      %27 = vsyncadd [#allocation6], %s26
      %s28 = sshll.u32 [#allocation5], 4
      %s29 = int_to_ptr.vmem [resolvable:$true] %s28
      %34 = dma.hbm_to_vmem [thread:$0]  %s1, 2048, %s29, [#allocation6], 128, 128, 8
    $region9: #{tpu_custom_call.1} parent=1 // pred_fallthru
      _
    // Predicated region
    $region10: #{tpu_custom_call.1} parent=1 // pred_check
      _
    $region11: #{tpu_custom_call.1} parent=1 // pred_check_branch
      %36 = sbr.rel (0) target = $region13
    $region12: #{tpu_custom_call.1} parent=1 // pred_region
      _
    $region13: #{tpu_custom_call.1} parent=1 // pred_fallthru
      _
    // Predicated region
    $region14: #{tpu_custom_call.1} parent=1 // pred_check
      _
    $region15: #{tpu_custom_call.1} parent=1 // pred_check_branch
      %38 = sbr.rel (0) target = $region17
    $region16: #{tpu_custom_call.1} parent=1 // pred_region
      %39 = dma.done [#allocation3], 128
    $region17: #{tpu_custom_call.1} parent=1 // pred_fallthru
      _
    // Predicated region
    $region18: #{tpu_custom_call.1} parent=1 // pred_check
      _
    $region19: #{tpu_custom_call.1} parent=1 // pred_check_branch
      %41 = sbr.rel (0) target = $region21
    $region20: #{tpu_custom_call.1} parent=1 // pred_region
      %42 = dma.done [#allocation6], 2048
    $region21: #{tpu_custom_call.1} parent=1 // pred_fallthru
      _
    %v44 = vld [vmem:[#allocation2] sm:$0xff]
    %v45 = vpack.c.bf16 %v44, %v44
    %v46 = vld [vmem:[#allocation5] sm:$0xff]
    %v47 = vld [vmem:[#allocation5 + $0x8] sm:$0xff]
    %v48 = vld [vmem:[#allocation5 + $0x10] sm:$0xff]
    %v49 = vld [vmem:[#allocation5 + $0x18] sm:$0xff]
    %v50 = vld [vmem:[#allocation5 + $0x20] sm:$0xff]
    %v51 = vld [vmem:[#allocation5 + $0x28] sm:$0xff]
    %v52 = vld [vmem:[#allocation5 + $0x30] sm:$0xff]
    %v53 = vld [vmem:[#allocation5 + $0x38] sm:$0xff]
    %v54 = vld [vmem:[#allocation5 + $0x40] sm:$0xff]
    %v55 = vld [vmem:[#allocation5 + $0x48] sm:$0xff]
    %v56 = vld [vmem:[#allocation5 + $0x50] sm:$0xff]
    %v57 = vld [vmem:[#allocation5 + $0x58] sm:$0xff]
    %v58 = vld [vmem:[#allocation5 + $0x60] sm:$0xff]
    %v59 = vld [vmem:[#allocation5 + $0x68] sm:$0xff]
    %v60 = vld [vmem:[#allocation5 + $0x70] sm:$0xff]
    %v61 = vld [vmem:[#allocation5 + $0x78] sm:$0xff]
    %v62 = vld [vmem:[%s2] sm:$0x3]
    %v64 = vlaneseq
    %v65 = vshrl.u32 %v64, 7
    %v66 = vsub.s32 0, %v65
    %v67 = vrot.slane %v62, %v66
    %v68 = vlaneseq
    %v69 = vshrl.u32 %v68, 7
    %v70 = vsub.s32 1, %v69
    %v71 = vrot.slane %v62, %v70
    %v90 = vunpack.c.l.b16 %v46
    %v91 = vunpack.c.h.b16 %v46
    %v92 = vunpack.c.l.b16 %v47
    %v93 = vunpack.c.h.b16 %v47
    %v94 = vunpack.c.l.b16 %v48
    %v95 = vunpack.c.h.b16 %v48
    %v96 = vunpack.c.l.b16 %v49
    %v97 = vunpack.c.h.b16 %v49
    %v98 = vunpack.c.l.b16 %v50
    %v99 = vunpack.c.h.b16 %v50
    %v100 = vunpack.c.l.b16 %v51
    %v101 = vunpack.c.h.b16 %v51
    %v102 = vunpack.c.l.b16 %v52
    %v103 = vunpack.c.h.b16 %v52
    %v104 = vunpack.c.l.b16 %v53
    %v105 = vunpack.c.h.b16 %v53
    %v106 = vunpack.c.l.b16 %v54
    %v107 = vunpack.c.h.b16 %v54
    %v108 = vunpack.c.l.b16 %v55
    %v109 = vunpack.c.h.b16 %v55
    %v110 = vunpack.c.l.b16 %v56
    %v111 = vunpack.c.h.b16 %v56
    %v112 = vunpack.c.l.b16 %v57
    %v113 = vunpack.c.h.b16 %v57
    %v114 = vunpack.c.l.b16 %v58
    %v115 = vunpack.c.h.b16 %v58
    %v116 = vunpack.c.l.b16 %v59
    %v117 = vunpack.c.h.b16 %v59
    %v118 = vunpack.c.l.b16 %v60
    %v119 = vunpack.c.h.b16 %v60
    %v120 = vunpack.c.l.b16 %v61
    %v121 = vunpack.c.h.b16 %v61
    %v122 = vpack.c.b16 %v92, %v90
    %v123 = vpack.c.b16 %v93, %v91
    %v124 = vpack.c.b16 %v96, %v94
    %v125 = vpack.c.b16 %v97, %v95
    %v126 = vpack.c.b16 %v100, %v98
    %v127 = vpack.c.b16 %v101, %v99
    %v128 = vpack.c.b16 %v104, %v102
    %v129 = vpack.c.b16 %v105, %v103
    %v130 = vpack.c.b16 %v108, %v106
    %v131 = vpack.c.b16 %v109, %v107
    %v132 = vpack.c.b16 %v112, %v110
    %v133 = vpack.c.b16 %v113, %v111
    %v134 = vpack.c.b16 %v116, %v114
    %v135 = vpack.c.b16 %v117, %v115
    %v136 = vpack.c.b16 %v120, %v118
    %v137 = vpack.c.b16 %v121, %v119
    %154 = vmatprep.subr.bf16.mxu0 %v123
    %155 = vmatpush1.bf16.msra.mxu0 %v122
    %156 = vmatprep.subr.bf16.mxu0 %v125
    %157 = vmatpush1.bf16.msra.mxu0 %v124
    %158 = vmatprep.subr.bf16.mxu0 %v127
    %159 = vmatpush1.bf16.msra.mxu0 %v126
    %160 = vmatprep.subr.bf16.mxu0 %v129
    %161 = vmatpush1.bf16.msra.mxu0 %v128
    %162 = vmatprep.subr.bf16.mxu0 %v131
    %163 = vmatpush1.bf16.msra.mxu0 %v130
    %164 = vmatprep.subr.bf16.mxu0 %v133
    %165 = vmatpush1.bf16.msra.mxu0 %v132
    %166 = vmatprep.subr.bf16.mxu0 %v135
    %167 = vmatpush1.bf16.msra.mxu0 %v134
    %168 = vmatprep.subr.bf16.mxu0 %v137
    %169 = vmatpush1.bf16.msra.mxu0 %v136
    %170 = vmatprep.subr.bf16.mxu0 0
    %171 = vmatpush1.bf16.msra.mxu0 0
    %172 = vmatprep.subr.bf16.mxu0 0
    %173 = vmatpush1.bf16.msra.mxu0 0
    %174 = vmatprep.subr.bf16.mxu0 0
    %175 = vmatpush1.bf16.msra.mxu0 0
    %176 = vmatprep.subr.bf16.mxu0 0
    %177 = vmatpush1.bf16.msra.mxu0 0
    %178 = vmatprep.subr.bf16.mxu0 0
    %179 = vmatpush1.bf16.msra.mxu0 0
    %180 = vmatprep.subr.bf16.mxu0 0
    %181 = vmatpush1.bf16.msra.mxu0 0
    %182 = vmatprep.subr.bf16.mxu0 0
    %183 = vmatpush1.bf16.msra.mxu0 0
    %184 = vmatprep.subr.bf16.mxu0 0
    %185 = vmatpush1.bf16.msra.mxu0 0
    %186 = vmatprep.mubr.bf16.mxu0 0
    %187 = vmatmul.mubr.bf16.gmra.mrb[0].mxu0 %v45
    %v188 = vpop.f32.mrb[0].mxu0
    %v189 = vadd.f32 %v67, %v188
    %v190 = vpop.f32.mrb[0].mxu0
    %v191 = vadd.f32 %v71, %v190
    %v192 = vpop.f32.mrb[0].mxu0
    %v193 = vpop.f32.mrb[0].mxu0
    %194 = vdwg.mxu0
    %v195 = vmax.f32 %v189, 0.0
    %v196 = vmax.f32 %v191, 0.0
    %v199 = vcombine.low %v195, %v196
    %v200 = vcombine.high %v195, %v196
    %v202 = vunpack.c.l.s4 1983009808
    %v203 = vunpack.c.0.s8 %v202
    %v204 = vlaneseq
    %v205 = vshrl.u32 %v204, 7
    %v206 = vsub.s32 %v203, %v205
    %v207 = vrot.slane %v199, %v206
    %v209 = vunpack.c.l.s4 1983009808
    %v210 = vunpack.c.0.s8 %v209
    %v211 = vlaneseq
    %v212 = vshrl.u32 %v211, 7
    %v213 = vsub.s32 %v210, %v212
    %v214 = vrot.slane %v200, %v213
    %v215 = vcombine.high %v207, %v207
    %v216 = vcombine.high %v214, %v214
    %221 = vst [vmem:[#allocation7] sm:$0xf] %v207
    %222 = vst [vmem:[#allocation7 + $0x4] sm:$0xf] %v215
    %223 = vst [vmem:[#allocation7 + $0x8] sm:$0xf] %v214
    %224 = vst [vmem:[#allocation7 + $0xc] sm:$0xf] %v216
    // Predicated region
    $region22: #{tpu_custom_call.1} parent=1 // pred_check
      _
    $region23: #{tpu_custom_call.1} parent=1 // pred_check_branch
      %226 = sbr.rel (0) target = $region25
    $region24: #{tpu_custom_call.1} parent=1 // pred_region
      %s228 = ssub.s32 256, 64
      %229 = vsyncadd [#allocation4], %s228
      %s230 = sshll.u32 [#allocation7], 4
      %s231 = int_to_ptr.vmem [resolvable:$true] %s230
      %236 = dma.vmem_to_hbm [thread:$0]  %s231, 64, %s3, [#allocation4], 64, 64, 4
    $region25: #{tpu_custom_call.1} parent=1 // pred_fallthru
      _
    // Predicated region
    $region26: #{tpu_custom_call.1} parent=1 // pred_check
      _
    $region27: #{tpu_custom_call.1} parent=1 // pred_check_branch
      %238 = sbr.rel (0) target = $region29
    $region28: #{tpu_custom_call.1} parent=1 // pred_region
      %239 = dma.done [#allocation4], 256
    $region29: #{tpu_custom_call.1} parent=1 // pred_fallthru
      _
    %240 = vsyncpa [#allocation3], 1
    %241 = vsyncpa [#allocation6], 1
    %242 = vsyncpa [#allocation4], 1

</llo_original>
